<compile_context>
chip_gen: v5e
topology: v5e:2x2
jax: 0.10.0
libtpu: 0.0.40
codegen_flags: <defaults>
</compile_context>

<pallas_src>
import numpy as np

import jax
import jax.numpy as jnp
from jax.experimental import pallas as pl
from jax.experimental.pallas import tpu as pltpu

# Pin the default so kernel-side and reference-side dots see identical precision even
# if an explicit kwarg is ever dropped (default single-pass bf16 vs full f32 was the
# likely source of the previous >5e-3 mismatch).
jax.config.update("jax_default_matmul_precision", "highest")

block_size = 8
n_embd = 32

_HIGHEST = jax.lax.Precision.HIGHEST
_NEG_BIG = -1e30  # large finite negative instead of -inf (review correctness note)


def make_fused_qkv_weight(wq, wk, wv):
    """Fuse the three (C, H) projection weights into one (C, 3H) slab.

    Done once at "module init" (review item: do not re-concatenate every forward).
    """
    return jnp.concatenate([wq, wk, wv], axis=1)


def make_causal_bias(T):
    """Compile-time-constant additive causal mask: 0 where row >= col, else -1e30.

    Built with numpy once (review item: no iota/shift/compare mask construction at
    runtime inside the kernel).
    """
    tril = np.tril(np.ones((T, T), dtype=np.float32))
    bias = np.where(tril == 0.0, np.float32(_NEG_BIG), np.float32(0.0))
    return jnp.asarray(bias, dtype=jnp.float32)


def head_forward(x, wqkv, causal_bias):
    """Single-head causal attention, faithful to the PyTorch `Head` module.

    x           : (B, T, C) float32
    wqkv        : (C, 3H) float32 fused [wq | wk | wv] (transposed nn.Linear weights)
    causal_bias : (T, T) float32 additive mask (0 / -1e30)
    returns     : (B, T, H) float32
    """
    B, T, C = x.shape
    H3 = wqkv.shape[1]
    H = H3 // 3

    def kernel(x_ref, w_ref, bias_ref, o_ref):
        xv = x_ref[0]                                   # (T, C) for this batch
        w = w_ref[...]                                  # (C, 3H)

        # One fused projection matmul, then static lane slices for q/k/v.
        qkv = jnp.dot(xv, w, preferred_element_type=jnp.float32,
                      precision=_HIGHEST)               # (T, 3H)
        q = qkv[:, 0:H]
        k = qkv[:, H:2 * H]
        v = qkv[:, 2 * H:3 * H]

        # Attention scores — faithful to the module: NO 1/sqrt(H) scaling.
        wei = jnp.dot(q, k.T, preferred_element_type=jnp.float32,
                      precision=_HIGHEST)               # (T, T)

        # Preloaded additive causal bias: masked entries become exact zeros after
        # exp(); every column keeps its diagonal entry so no column is fully masked.
        wei = wei + bias_ref[...]

        # softmax over dim=1 of the original (B, T, T) tensor == axis 0 (query/row
        # axis) of this per-batch (T, T) tile, exactly as in the PyTorch source.
        m = jnp.max(wei, axis=0, keepdims=True)         # (1, T), finite
        e = jnp.exp(wei - m)                            # masked entries -> exact 0
        s = jnp.sum(e, axis=0, keepdims=True)           # (1, T), > 0
        p = e / s                                       # exact divide (approx recip
                                                        # was the dominant error src)

        out = jnp.dot(p, v, preferred_element_type=jnp.float32,
                      precision=_HIGHEST)               # (T, H)
        o_ref[0] = out.astype(o_ref.dtype)

    return pl.pallas_call(
        kernel,
        out_shape=jax.ShapeDtypeStruct((B, T, H), jnp.float32),
        grid=(B,),
        in_specs=[
            pl.BlockSpec((1, T, C), lambda b: (b, 0, 0)),   # per-batch activations
            pl.BlockSpec((C, H3), lambda b: (0, 0)),        # fused weight, resident
            pl.BlockSpec((T, T), lambda b: (0, 0)),         # causal bias, resident
        ],
        out_specs=pl.BlockSpec((1, T, H), lambda b: (b, 0, 0)),
        # Batch axis is independent -> "parallel" (megacore-shardable).
        # TODO(synk): on v7x with large B, switch to pltpu.CORE_PARALLEL.
        compiler_params=pltpu.CompilerParams(dimension_semantics=("parallel",)),
    )(x, wqkv, causal_bias)


def reference_forward(x, wq, wk, wv):
    """Pure-JAX reference mirroring the PyTorch module exactly (f32, full precision)."""
    q = jnp.matmul(x, wq, precision=_HIGHEST)
    k = jnp.matmul(x, wk, precision=_HIGHEST)
    v = jnp.matmul(x, wv, precision=_HIGHEST)
    wei = jnp.matmul(q, jnp.swapaxes(k, -2, -1), precision=_HIGHEST)  # (B, T, T)
    T = x.shape[1]
    tril = jnp.tril(jnp.ones((T, T), dtype=jnp.float32))
    wei = jnp.where(tril == 0, -jnp.inf, wei)
    # F.softmax(wei, dim=1) written out explicitly (identical math).
    m = jnp.max(wei, axis=1, keepdims=True)
    e = jnp.exp(wei - m)
    wei = e / jnp.sum(e, axis=1, keepdims=True)
    return jnp.matmul(wei, v, precision=_HIGHEST)


if __name__ == "__main__":
    B, T, C = 2, block_size, n_embd                     # (2, 8, 32)
    head_size = 16

    key = jax.random.PRNGKey(0)
    kx, kq, kk, kv = jax.random.split(key, 4)

    x = jax.random.normal(kx, (B, T, C), dtype=jnp.float32)

    # nn.Linear(n_embd, head_size, bias=False) weight has shape (head_size, n_embd);
    # we store the transpose (n_embd, head_size) so the kernel computes x @ W.
    scale = 1.0 / jnp.sqrt(jnp.float32(n_embd))
    wq = jax.random.normal(kq, (C, head_size), dtype=jnp.float32) * scale
    wk = jax.random.normal(kk, (C, head_size), dtype=jnp.float32) * scale
    wv = jax.random.normal(kv, (C, head_size), dtype=jnp.float32) * scale

    # "Module init": fuse the weights and build the constant causal bias ONCE.
    wqkv = make_fused_qkv_weight(wq, wk, wv)
    causal_bias = make_causal_bias(T)

    out = head_forward(x, wqkv, causal_bias)
    out = jax.block_until_ready(out)

    ref = reference_forward(x, wq, wk, wv)
    assert out.shape == (B, T, head_size)
    assert jnp.allclose(out, ref, atol=1e-4, rtol=1e-4), "mismatch vs reference"

    print("KERNEL_OK")
</pallas_src>

<mosaic_0001>
module attributes {stable_mosaic.version = 11 : i64} {
  func.func @kernel(%arg0: i32, %arg1: memref<1x8x32xf32, #tpu.memory_space<vmem>>, %arg2: memref<32x48xf32, #tpu.memory_space<vmem>>, %arg3: memref<8x8xf32, #tpu.memory_space<vmem>>, %arg4: memref<1x8x16xf32, #tpu.memory_space<vmem>>) attributes {dimension_semantics = [#tpu.dimension_semantics<parallel>], iteration_bounds = array<i64: 2>, scalar_prefetch = 0 : i64, scratch_operands = 0 : i64, tpu.core_type = #tpu.core_type<tc>, window_params = [{transform_indices = @transform_0, window_bounds = array<i64: 1, 8, 32>}, {pipeline_mode = #tpu.pipeline_mode<synchronous>, transform_indices = @transform_1, window_bounds = array<i64: 32, 48>}, {pipeline_mode = #tpu.pipeline_mode<synchronous>, transform_indices = @transform_2, window_bounds = array<i64: 8, 8>}, {transform_indices = @transform_3, window_bounds = array<i64: 1, 8, 16>}]} {
    %c0 = arith.constant 0 : index
    %c0_0 = arith.constant 0 : index
    %c0_1 = arith.constant 0 : index
    %0 = vector.load %arg1[%c0, %c0_0, %c0_1] : memref<1x8x32xf32, #tpu.memory_space<vmem>>, vector<1x8x32xf32>
    %1 = vector.shape_cast %0 : vector<1x8x32xf32> to vector<8x32xf32>
    %c0_2 = arith.constant 0 : index
    %c0_3 = arith.constant 0 : index
    %2 = vector.load %arg2[%c0_2, %c0_3] : memref<32x48xf32, #tpu.memory_space<vmem>>, vector<32x48xf32>
    %cst = arith.constant dense<0.000000e+00> : vector<8x48xf32>
    %3 = tpu.matmul %1, %2, %cst {dimension_numbers = #tpu.dot_dimension_numbers<[1], [0], [0], [1], [0, 0, 1, 1], [], []>, precision = #tpu.contract_precision<fp32>} : vector<8x32xf32>, vector<32x48xf32>, vector<8x48xf32> -> vector<8x48xf32>
    %4 = vector.extract_strided_slice %3 {offsets = [0, 0], sizes = [8, 16], strides = [1, 1]} : vector<8x48xf32> to vector<8x16xf32>
    %5 = vector.extract_strided_slice %3 {offsets = [0, 16], sizes = [8, 16], strides = [1, 1]} : vector<8x48xf32> to vector<8x16xf32>
    %6 = vector.extract_strided_slice %3 {offsets = [0, 32], sizes = [8, 16], strides = [1, 1]} : vector<8x48xf32> to vector<8x16xf32>
    %7 = tpu.transpose %5, [1, 0] : vector<8x16xf32> -> vector<16x8xf32>
    %cst_4 = arith.constant dense<0.000000e+00> : vector<8x8xf32>
    %8 = tpu.matmul %4, %7, %cst_4 {dimension_numbers = #tpu.dot_dimension_numbers<[1], [0], [0], [1], [0, 0, 1, 1], [], []>, precision = #tpu.contract_precision<fp32>} : vector<8x16xf32>, vector<16x8xf32>, vector<8x8xf32> -> vector<8x8xf32>
    %c0_5 = arith.constant 0 : index
    %c0_6 = arith.constant 0 : index
    %9 = vector.load %arg3[%c0_5, %c0_6] : memref<8x8xf32, #tpu.memory_space<vmem>>, vector<8x8xf32>
    %10 = arith.addf %8, %9 : vector<8x8xf32>
    %cst_7 = arith.constant dense<0xFF800000> : vector<8xf32>
    %11 = vector.multi_reduction <maximumf>, %10, %cst_7 [0] : vector<8x8xf32> to vector<8xf32>
    %12 = vector.shape_cast %11 : vector<8xf32> to vector<1x8xf32>
    %13 = vector.broadcast %12 : vector<1x8xf32> to vector<8x8xf32>
    %14 = arith.subf %10, %13 : vector<8x8xf32>
    %15 = math.exp %14 : vector<8x8xf32>
    %cst_8 = arith.constant dense<0.000000e+00> : vector<8xf32>
    %16 = vector.multi_reduction <add>, %15, %cst_8 [0] : vector<8x8xf32> to vector<8xf32>
    %17 = vector.shape_cast %16 : vector<8xf32> to vector<1x8xf32>
    %18 = vector.broadcast %17 : vector<1x8xf32> to vector<8x8xf32>
    %19 = arith.divf %15, %18 : vector<8x8xf32>
    %cst_9 = arith.constant dense<0.000000e+00> : vector<8x16xf32>
    %20 = tpu.matmul %19, %6, %cst_9 {dimension_numbers = #tpu.dot_dimension_numbers<[1], [0], [0], [1], [0, 0, 1, 1], [], []>, precision = #tpu.contract_precision<fp32>} : vector<8x8xf32>, vector<8x16xf32>, vector<8x16xf32> -> vector<8x16xf32>
    %c0_10 = arith.constant 0 : index
    %c0_11 = arith.constant 0 : index
    %c0_12 = arith.constant 0 : index
    %21 = vector.load %arg4[%c0_10, %c0_11, %c0_12] : memref<1x8x16xf32, #tpu.memory_space<vmem>>, vector<1x8x16xf32>
    %22 = vector.shape_cast %21 : vector<1x8x16xf32> to vector<8x16xf32>
    %23 = vector.shape_cast %20 : vector<8x16xf32> to vector<1x8x16xf32>
    tpu.vector_store %arg4[%c0_10, %c0_11, %c0_12], %23 {strides = array<i32>} : memref<1x8x16xf32, #tpu.memory_space<vmem>>, vector<1x8x16xf32>,
    return
  }
  func.func @transform_0(%arg0: i32) -> (i32, i32, i32) {
    %c0_i32 = arith.constant 0 : i32
    %c0_i32_0 = arith.constant 0 : i32
    %c0_i32_1 = arith.constant 0 : i32
    return %arg0, %c0_i32, %c0_i32_0 : i32, i32, i32
  }
  func.func @transform_1(%arg0: i32) -> (i32, i32) {
    %c0_i32 = arith.constant 0 : i32
    %c0_i32_0 = arith.constant 0 : i32
    %c0_i32_1 = arith.constant 0 : i32
    return %c0_i32, %c0_i32_0 : i32, i32
  }
  func.func @transform_2(%arg0: i32) -> (i32, i32) {
    %c0_i32 = arith.constant 0 : i32
    %c0_i32_0 = arith.constant 0 : i32
    %c0_i32_1 = arith.constant 0 : i32
    return %c0_i32, %c0_i32_0 : i32, i32
  }
  func.func @transform_3(%arg0: i32) -> (i32, i32, i32) {
    %c0_i32 = arith.constant 0 : i32
    %c0_i32_0 = arith.constant 0 : i32
    %c0_i32_1 = arith.constant 0 : i32
    return %arg0, %c0_i32, %c0_i32_0 : i32, i32, i32
  }
}

</mosaic_0001>

<llo_original>
// kernel: tpu_custom_call.1
$region0: #{tpu_custom_call.1}
  #allocation0 [shape = 'u32[]', space=smem, size = 0x4, offset = 0x4, fixed_abs, tag = 'smem constant byte address 0x4 - core index']
  #allocation1 [shape = 'u32[72,128]{1,0:T(1,128)}', space=vmem, size = 0x9000, scoped, tag = 'internal scratch']
  %s0 = inlined_call_operand.hbm [shape: f32[2,8,32], index: 0, kind: input, shape index: {}]
  %s1 = inlined_call_operand.hbm [shape: f32[32,48], index: 1, kind: input, shape index: {}]
  %s2 = inlined_call_operand.hbm [shape: f32[8,8], index: 2, kind: input, shape index: {}]
  %s3 = inlined_call_operand.hbm [shape: f32[2,8,16], index: 3, kind: output, shape index: {}]
  %s4 = sld [smem:[#allocation0]]
  $region57: #{tpu_custom_call.1} parent=0
    _
  %s6 = ssub.s32 1, %s4
  %s7 = scalar_select 0, %s6, %s4
  $region1: #{tpu_custom_call.1} parent=0
    #allocation2 [shape = 'u8[8192]{0}', space=vmem, size = 0x2000, scoped, tag = 'input window, operand 0']
    #allocation3 [shape = 's32[2]{0}', space=sflag, size = 0x8, scoped, tag = 'scoped memory for tpu_custom_call.1']
    #allocation4 [shape = 's32[2]{0}', space=sflag, size = 0x8, scoped, tag = 'scoped memory for tpu_custom_call.1']
    #allocation5 [shape = 'u8[16384]{0}', space=vmem, size = 0x4000, scoped, tag = 'input window, operand 1, single buffered']
    #allocation6 [shape = 's32[1]{0}', space=sflag, size = 0x4, scoped, tag = 'scoped memory for tpu_custom_call.1']
    #allocation7 [shape = 'u8[4096]{0}', space=vmem, size = 0x1000, scoped, tag = 'input window, operand 2, single buffered']
    #allocation8 [shape = 'u8[8192]{0}', space=vmem, size = 0x2000, scoped, tag = 'output window, operand 0']
    %8 = vsyncpa [#allocation3], 0
    %s9 = scalar_lea.sflag [#allocation3], 1
    %10 = vsyncpa %s9, 0
    %11 = vsyncpa [#allocation6], 0
    %12 = vsyncpa [#allocation4], 0
    %s13 = scalar_lea.sflag [#allocation4], 1
    %14 = vsyncpa %s13, 0
    loop: start=0, step=1, limit=4
    $region2: #{tpu_custom_call.1} parent=1 // loop_pre_header
      _
    $region3: #{tpu_custom_call.1} parent=1 // loop_header
      %s16 = sphi 0, %s20
      %p17 = scmp.ge.s32.totalorder %s16, 4
      %s26 = sphi 0, %s28
      %s29 = sphi 0, %s26
      %s30 = sphi 0, %s29
      %s46 = sphi 0, %s30
      %s50 = sphi 0, %s50
      %s52 = sphi 0, %s50
      %s53 = sphi 0, %s52
      %s67 = sphi 0, %s53
      %s71 = sphi 0, %s71
      %s73 = sphi 0, %s71
      %s74 = sphi 0, %s73
      %s88 = sphi 0, %s74
      %s94 = sphi 0, %s96
      %s97 = sphi 0, %s94
      %s98 = sphi 0, %s97
      %s114 = sphi 0, %s98
    $region4: #{tpu_custom_call.1} parent=1 // loop_header_branch
      %19 = sbr.rel (%p17) target = $region8
    $region5: #{tpu_custom_call.1} parent=1 // loop_body
      %s21 = ssub.s32 %s16, 1
      %s22 = ssub.s32 %s16, 2
      %s23 = sadd.s32 %s16, 1
      %s24 = ssub.s32 %s16, %s23
      %p25 = scmp.eq.s32.totalorder %s24, 0
      %s27 = sadd.s32 %s26, 1
      %s28 = scalar_select %p25, %s26, %s27
      %p31 = pneg %p25
      %p32 = scmp.eq.s32.totalorder %s16, 1
      %p33 = por %p31, %p32
      %p34 = scmp.ne.s32.totalorder %s26, %s29
      %p35 = scmp.eq.s32.totalorder %s16, 0
      %p36 = por %p34, %p35
      %p37 = scmp.ne.s32.totalorder %s26, %s29
      %p38 = scmp.eq.s32.totalorder %s21, 1
      %p39 = por %p37, %p38
      %p40 = scmp.ne.s32.totalorder %s29, %s30
      %p41 = scmp.eq.s32.totalorder %s21, 0
      %p42 = por %p40, %p41
      %p43 = scmp.ne.s32.totalorder %s29, %s30
      %p44 = scmp.eq.s32.totalorder %s22, 1
      %p45 = por %p43, %p44
      %p47 = scmp.ne.s32.totalorder %s30, %s46
      %p48 = scmp.eq.s32.totalorder %s22, 0
      %p49 = por %p47, %p48
      %s51 = sadd.s32 %s50, 1
      %p54 = scmp.eq.s32.totalorder %s16, 1
      %p55 = scmp.ne.s32.totalorder %s50, %s52
      %p56 = scmp.eq.s32.totalorder %s16, 0
      %p57 = por %p55, %p56
      %p58 = scmp.ne.s32.totalorder %s50, %s52
      %p59 = scmp.eq.s32.totalorder %s21, 1
      %p60 = por %p58, %p59
      %p61 = scmp.ne.s32.totalorder %s52, %s53
      %p62 = scmp.eq.s32.totalorder %s21, 0
      %p63 = por %p61, %p62
      %p64 = scmp.ne.s32.totalorder %s52, %s53
      %p65 = scmp.eq.s32.totalorder %s22, 1
      %p66 = por %p64, %p65
      %p68 = scmp.ne.s32.totalorder %s53, %s67
      %p69 = scmp.eq.s32.totalorder %s22, 0
      %p70 = por %p68, %p69
      %s72 = sadd.s32 %s71, 1
      %p75 = scmp.eq.s32.totalorder %s16, 1
      %p76 = scmp.ne.s32.totalorder %s71, %s73
      %p77 = scmp.eq.s32.totalorder %s16, 0
      %p78 = por %p76, %p77
      %p79 = scmp.ne.s32.totalorder %s71, %s73
      %p80 = scmp.eq.s32.totalorder %s21, 1
      %p81 = por %p79, %p80
      %p82 = scmp.ne.s32.totalorder %s73, %s74
      %p83 = scmp.eq.s32.totalorder %s21, 0
      %p84 = por %p82, %p83
      %p85 = scmp.ne.s32.totalorder %s73, %s74
      %p86 = scmp.eq.s32.totalorder %s22, 1
      %p87 = por %p85, %p86
      %p89 = scmp.ne.s32.totalorder %s74, %s88
      %p90 = scmp.eq.s32.totalorder %s22, 0
      %p91 = por %p89, %p90
      %s92 = ssub.s32 %s16, %s23
      %p93 = scmp.eq.s32.totalorder %s92, 0
      %s95 = sadd.s32 %s94, 1
      %s96 = scalar_select %p93, %s94, %s95
      %p99 = pneg %p93
      %p100 = scmp.eq.s32.totalorder %s16, 1
      %p101 = por %p99, %p100
      %p102 = scmp.ne.s32.totalorder %s94, %s97
      %p103 = scmp.eq.s32.totalorder %s16, 0
      %p104 = por %p102, %p103
      %p105 = scmp.ne.s32.totalorder %s94, %s97
      %p106 = scmp.eq.s32.totalorder %s21, 1
      %p107 = por %p105, %p106
      %p108 = scmp.ne.s32.totalorder %s97, %s98
      %p109 = scmp.eq.s32.totalorder %s21, 0
      %p110 = por %p108, %p109
      %p111 = scmp.ne.s32.totalorder %s97, %s98
      %p112 = scmp.eq.s32.totalorder %s22, 1
      %p113 = por %p111, %p112
      %p115 = scmp.ne.s32.totalorder %s98, %s114
      %p116 = scmp.eq.s32.totalorder %s22, 0
      %p117 = por %p115, %p116
      %p118 = scmp.le.s32.totalorder 1, %s16
      %p119 = scmp.lt.s32.totalorder %s16, 3
      %p120 = pnand %p118, %p119
      %p121 = pneg %p120
      // Predicated region
      $region9: #{tpu_custom_call.1} parent=5 // pred_check
        _
      $region10: #{tpu_custom_call.1} parent=5 // pred_check_branch
        %123 = sbr.rel (%p120) target = $region12
      $region11: #{tpu_custom_call.1} parent=5 // pred_region
        %s124 = ssub.s32 %s16, 1
        // Predicated region
        $region13: #{tpu_custom_call.1} parent=11 // pred_check
          %p125 = pneg %p63
        $region14: #{tpu_custom_call.1} parent=11 // pred_check_branch
          %127 = sbr.rel (%p125) target = $region16
        $region15: #{tpu_custom_call.1} parent=11 // pred_region
          %129 = vsyncadd [#allocation6], 0
          %s130 = sshll.u32 %s1, 4
          %s131 = int_to_ptr.hbm [resolvable:$true] %s130
          %s132 = sshll.u32 [#allocation5], 4
          %s133 = int_to_ptr.vmem [resolvable:$true] %s132
          %138 = dma.hbm_to_vmem [thread:$0]  %s131, 512, %s133, [#allocation6], 128, 128, 8
        $region16: #{tpu_custom_call.1} parent=11 // pred_fallthru
          _
        // Predicated region
        $region17: #{tpu_custom_call.1} parent=11 // pred_check
          %p139 = pneg %p84
        $region18: #{tpu_custom_call.1} parent=11 // pred_check_branch
          %141 = sbr.rel (%p139) target = $region20
        $region19: #{tpu_custom_call.1} parent=11 // pred_region
          %143 = vsyncadd [#allocation6], 0
          %s145 = sshll.u32 %s2, 4
          %s146 = int_to_ptr.hbm [resolvable:$true] %s145
          %s147 = sshll.u32 [#allocation7], 4
          %s148 = int_to_ptr.vmem [resolvable:$true] %s147
          %150 = dma.hbm_to_vmem [thread:$0]  %s146, 128, %s148, [#allocation6]
        $region20: #{tpu_custom_call.1} parent=11 // pred_fallthru
          _
      $region12: #{tpu_custom_call.1} parent=5 // pred_fallthru
        _
      %p151 = scmp.lt.s32.totalorder %s16, 2
      // Predicated region
      $region21: #{tpu_custom_call.1} parent=5 // pred_check
        %p152 = pneg %p151
      $region22: #{tpu_custom_call.1} parent=5 // pred_check_branch
        %154 = sbr.rel (%p152) target = $region24
      $region23: #{tpu_custom_call.1} parent=5 // pred_region
        // Predicated region
        $region25: #{tpu_custom_call.1} parent=23 // pred_check
          %p155 = pneg %p36
        $region26: #{tpu_custom_call.1} parent=23 // pred_check_branch
          %157 = sbr.rel (%p155) target = $region28
        $region27: #{tpu_custom_call.1} parent=23 // pred_region
          %s158 = sand.u32 %s26, 1
          %s159 = scalar_lea.sflag [#allocation3], %s158
          %s160 = sand.u32 %s26, 1
          %s161 = smul.addr %s160, 8
          %s162 = scalar_lea.vmem [#allocation2], %s161
          %164 = vsyncadd %s159, 0
          %s165 = smul.addr %s16, 8
          %s166 = scalar_lea.hbm %s0, %s165
          %s168 = sshll.u32 %s166, 4
          %s169 = int_to_ptr.hbm [resolvable:$true] %s168
          %s170 = sshll.u32 %s162, 4
          %s171 = int_to_ptr.vmem [resolvable:$true] %s170
          %173 = dma.hbm_to_vmem [thread:$0]  %s169, 128, %s171, %s159
        $region28: #{tpu_custom_call.1} parent=23 // pred_fallthru
          _
      $region24: #{tpu_custom_call.1} parent=5 // pred_fallthru
        _
      %p174 = scmp.le.s32.totalorder 1, %s16
      %p175 = scmp.lt.s32.totalorder %s16, 3
      %p176 = pnand %p174, %p175
      %p177 = pneg %p176
      // Predicated region
      $region29: #{tpu_custom_call.1} parent=5 // pred_check
        _
      $region30: #{tpu_custom_call.1} parent=5 // pred_check_branch
        %179 = sbr.rel (%p176) target = $region32
      $region31: #{tpu_custom_call.1} parent=5 // pred_region
        %s180 = ssub.s32 %s16, 1
        %s181 = sand.u32 %s29, 1
        %s182 = scalar_lea.sflag [#allocation3], %s181
        %s183 = sand.u32 %s29, 1
        %s184 = smul.addr %s183, 8
        %s185 = scalar_lea.vmem [#allocation2], %s184
        // Predicated region
        $region33: #{tpu_custom_call.1} parent=31 // pred_check
          %p186 = pneg %p42
        $region34: #{tpu_custom_call.1} parent=31 // pred_check_branch
          %188 = sbr.rel (%p186) target = $region36
        $region35: #{tpu_custom_call.1} parent=31 // pred_region
          %190 = dma.done %s182, 128
        $region36: #{tpu_custom_call.1} parent=31 // pred_fallthru
          _
        // Predicated region
        $region37: #{tpu_custom_call.1} parent=31 // pred_check
          %p191 = pneg %p63
        $region38: #{tpu_custom_call.1} parent=31 // pred_check_branch
          %193 = sbr.rel (%p191) target = $region40
        $region39: #{tpu_custom_call.1} parent=31 // pred_region
          %195 = dma.done [#allocation6], 512
        $region40: #{tpu_custom_call.1} parent=31 // pred_fallthru
          _
        // Predicated region
        $region41: #{tpu_custom_call.1} parent=31 // pred_check
          %p196 = pneg %p84
        $region42: #{tpu_custom_call.1} parent=31 // pred_check_branch
          %198 = sbr.rel (%p196) target = $region44
        $region43: #{tpu_custom_call.1} parent=31 // pred_region
          %200 = dma.done [#allocation6], 128
        $region44: #{tpu_custom_call.1} parent=31 // pred_fallthru
          _
        %s201 = sand.u32 %s29, 1
        %s202 = scalar_lea.sflag [#allocation3], %s201
        %s203 = sand.u32 %s29, 1
        %s204 = smul.addr %s203, 8
        %s205 = scalar_lea.vmem [#allocation2], %s204
        %p206 = pneg %p42
        %p207 = pneg %p39
        %p208 = pneg %p63
        %p209 = pneg %p60
        %p210 = pneg %p84
        %p211 = pneg %p81
        %p212 = pneg %p110
        %p213 = pneg %p107
        %s214 = sand.u32 %s97, 1
        %s215 = scalar_lea.sflag [#allocation4], %s214
        %s216 = sand.u32 %s97, 1
        %s217 = smul.addr %s216, 8
        %s218 = scalar_lea.vmem [#allocation8], %s217
        %v219 = vld [vmem:[%s185] sm:$0xff]
        %v220 = vld [vmem:[#allocation5] sm:$0xff]
        %v221 = vld [vmem:[#allocation5 + $0x8] sm:$0xff]
        %v222 = vld [vmem:[#allocation5 + $0x10] sm:$0xff]
        %v223 = vld [vmem:[#allocation5 + $0x18] sm:$0xff]
        %vm224 = vcmask 261120
        %v226 = vsel %vm224, %v219, 0
        %228 = vmatpush.msra.mxu0 0.0
        %229 = vmatpush.msra.mxu0 0.0
        %230 = vmatpush.msra.mxu0 0.0
        %231 = vmatpush.msra.mxu0 0.0
        %232 = vmatpush.msra.mxu0 0.0
        %233 = vmatpush.msra.mxu0 0.0
        %234 = vmatpush.msra.mxu0 0.0
        %235 = vmatpush.msra.mxu0 0.0
        %236 = vmatpush.msra.mxu0 0.0
        %237 = vmatpush.msra.mxu0 0.0
        %238 = vmatpush.msra.mxu0 0.0
        %239 = vmatpush.msra.mxu0 0.0
        %v240 = vand.u32 %v223, 4294901760
        %241 = vmatpush.msra.mxu0 %v240
        %v242 = vand.u32 %v222, 4294901760
        %243 = vmatpush.msra.mxu0 %v242
        %v244 = vand.u32 %v221, 4294901760
        %245 = vmatpush.msra.mxu0 %v244
        %v246 = vand.u32 %v220, 4294901760
        %247 = vmatpush.msra.mxu0 %v246
        %v248 = vand.u32 %v226, 4294901760
        %v249 = vsub.f32 %v226, %v248
        %v250 = vand.u32 %v249, 4294901760
        %v251 = vsub.f32 %v249, %v250
        %v252 = vand.u32 %v251, 4294901760
        %253 = vmatmul.f32.gmra.mxu0 %v252
        %v254 = vpop.f32.mrf.mxu0
        %v255 = vadd.f32 0.0, %v254
        %256 = vdwg.mxu0
        %257 = vmatpush.msra.mxu0 0.0
        %258 = vmatpush.msra.mxu0 0.0
        %259 = vmatpush.msra.mxu0 0.0
        %260 = vmatpush.msra.mxu0 0.0
        %261 = vmatpush.msra.mxu0 0.0
        %262 = vmatpush.msra.mxu0 0.0
        %263 = vmatpush.msra.mxu0 0.0
        %264 = vmatpush.msra.mxu0 0.0
        %265 = vmatpush.msra.mxu0 0.0
        %266 = vmatpush.msra.mxu0 0.0
        %267 = vmatpush.msra.mxu0 0.0
        %268 = vmatpush.msra.mxu0 0.0
        %v269 = vand.u32 %v223, 4294901760
        %v270 = vsub.f32 %v223, %v269
        %v271 = vand.u32 %v270, 4294901760
        %v272 = vsub.f32 %v270, %v271
        %v273 = vand.u32 %v272, 4294901760
        %274 = vmatpush.msra.mxu0 %v273
        %v275 = vand.u32 %v222, 4294901760
        %v276 = vsub.f32 %v222, %v275
        %v277 = vand.u32 %v276, 4294901760
        %v278 = vsub.f32 %v276, %v277
        %v279 = vand.u32 %v278, 4294901760
        %280 = vmatpush.msra.mxu0 %v279
        %v281 = vand.u32 %v221, 4294901760
        %v282 = vsub.f32 %v221, %v281
        %v283 = vand.u32 %v282, 4294901760
        %v284 = vsub.f32 %v282, %v283
        %v285 = vand.u32 %v284, 4294901760
        %286 = vmatpush.msra.mxu0 %v285
        %v287 = vand.u32 %v220, 4294901760
        %v288 = vsub.f32 %v220, %v287
        %v289 = vand.u32 %v288, 4294901760
        %v290 = vsub.f32 %v288, %v289
        %v291 = vand.u32 %v290, 4294901760
        %292 = vmatpush.msra.mxu0 %v291
        %v293 = vand.u32 %v226, 4294901760
        %294 = vmatmul.f32.gmra.mxu0 %v293
        %v295 = vpop.f32.mrf.mxu0
        %v296 = vadd.f32 %v255, %v295
        %297 = vdwg.mxu0
        %298 = vmatpush.msra.mxu0 0.0
        %299 = vmatpush.msra.mxu0 0.0
        %300 = vmatpush.msra.mxu0 0.0
        %301 = vmatpush.msra.mxu0 0.0
        %302 = vmatpush.msra.mxu0 0.0
        %303 = vmatpush.msra.mxu0 0.0
        %304 = vmatpush.msra.mxu0 0.0
        %305 = vmatpush.msra.mxu0 0.0
        %306 = vmatpush.msra.mxu0 0.0
        %307 = vmatpush.msra.mxu0 0.0
        %308 = vmatpush.msra.mxu0 0.0
        %309 = vmatpush.msra.mxu0 0.0
        %v310 = vand.u32 %v223, 4294901760
        %v311 = vsub.f32 %v223, %v310
        %312 = vmatpush.msra.mxu0 %v311
        %v313 = vand.u32 %v222, 4294901760
        %v314 = vsub.f32 %v222, %v313
        %315 = vmatpush.msra.mxu0 %v314
        %v316 = vand.u32 %v221, 4294901760
        %v317 = vsub.f32 %v221, %v316
        %318 = vmatpush.msra.mxu0 %v317
        %v319 = vand.u32 %v220, 4294901760
        %v320 = vsub.f32 %v220, %v319
        %321 = vmatpush.msra.mxu0 %v320
        %v322 = vand.u32 %v226, 4294901760
        %v323 = vsub.f32 %v226, %v322
        %324 = vmatmul.f32.gmra.mxu0 %v323
        %v325 = vpop.f32.mrf.mxu0
        %v326 = vadd.f32 %v296, %v325
        %327 = vdwg.mxu0
        %328 = vmatpush.msra.mxu0 0.0
        %329 = vmatpush.msra.mxu0 0.0
        %330 = vmatpush.msra.mxu0 0.0
        %331 = vmatpush.msra.mxu0 0.0
        %332 = vmatpush.msra.mxu0 0.0
        %333 = vmatpush.msra.mxu0 0.0
        %334 = vmatpush.msra.mxu0 0.0
        %335 = vmatpush.msra.mxu0 0.0
        %336 = vmatpush.msra.mxu0 0.0
        %337 = vmatpush.msra.mxu0 0.0
        %338 = vmatpush.msra.mxu0 0.0
        %339 = vmatpush.msra.mxu0 0.0
        %v340 = vand.u32 %v223, 4294901760
        %341 = vmatpush.msra.mxu0 %v340
        %v342 = vand.u32 %v222, 4294901760
        %343 = vmatpush.msra.mxu0 %v342
        %v344 = vand.u32 %v221, 4294901760
        %345 = vmatpush.msra.mxu0 %v344
        %v346 = vand.u32 %v220, 4294901760
        %347 = vmatpush.msra.mxu0 %v346
        %v348 = vand.u32 %v226, 4294901760
        %v349 = vsub.f32 %v226, %v348
        %v350 = vand.u32 %v349, 4294901760
        %351 = vmatmul.f32.gmra.mxu0 %v350
        %v352 = vpop.f32.mrf.mxu0
        %v353 = vadd.f32 %v326, %v352
        %354 = vdwg.mxu0
        %355 = vmatpush.msra.mxu0 0.0
        %356 = vmatpush.msra.mxu0 0.0
        %357 = vmatpush.msra.mxu0 0.0
        %358 = vmatpush.msra.mxu0 0.0
        %359 = vmatpush.msra.mxu0 0.0
        %360 = vmatpush.msra.mxu0 0.0
        %361 = vmatpush.msra.mxu0 0.0
        %362 = vmatpush.msra.mxu0 0.0
        %363 = vmatpush.msra.mxu0 0.0
        %364 = vmatpush.msra.mxu0 0.0
        %365 = vmatpush.msra.mxu0 0.0
        %366 = vmatpush.msra.mxu0 0.0
        %v367 = vand.u32 %v223, 4294901760
        %v368 = vsub.f32 %v223, %v367
        %v369 = vand.u32 %v368, 4294901760
        %370 = vmatpush.msra.mxu0 %v369
        %v371 = vand.u32 %v222, 4294901760
        %v372 = vsub.f32 %v222, %v371
        %v373 = vand.u32 %v372, 4294901760
        %374 = vmatpush.msra.mxu0 %v373
        %v375 = vand.u32 %v221, 4294901760
        %v376 = vsub.f32 %v221, %v375
        %v377 = vand.u32 %v376, 4294901760
        %378 = vmatpush.msra.mxu0 %v377
        %v379 = vand.u32 %v220, 4294901760
        %v380 = vsub.f32 %v220, %v379
        %v381 = vand.u32 %v380, 4294901760
        %382 = vmatpush.msra.mxu0 %v381
        %v383 = vand.u32 %v226, 4294901760
        %384 = vmatmul.f32.gmra.mxu0 %v383
        %v385 = vpop.f32.mrf.mxu0
        %v386 = vadd.f32 %v353, %v385
        %387 = vdwg.mxu0
        %388 = vmatpush.msra.mxu0 0.0
        %389 = vmatpush.msra.mxu0 0.0
        %390 = vmatpush.msra.mxu0 0.0
        %391 = vmatpush.msra.mxu0 0.0
        %392 = vmatpush.msra.mxu0 0.0
        %393 = vmatpush.msra.mxu0 0.0
        %394 = vmatpush.msra.mxu0 0.0
        %395 = vmatpush.msra.mxu0 0.0
        %396 = vmatpush.msra.mxu0 0.0
        %397 = vmatpush.msra.mxu0 0.0
        %398 = vmatpush.msra.mxu0 0.0
        %399 = vmatpush.msra.mxu0 0.0
        %v400 = vand.u32 %v223, 4294901760
        %401 = vmatpush.msra.mxu0 %v400
        %v402 = vand.u32 %v222, 4294901760
        %403 = vmatpush.msra.mxu0 %v402
        %v404 = vand.u32 %v221, 4294901760
        %405 = vmatpush.msra.mxu0 %v404
        %v406 = vand.u32 %v220, 4294901760
        %407 = vmatpush.msra.mxu0 %v406
        %v408 = vand.u32 %v226, 4294901760
        %409 = vmatmul.f32.gmra.mxu0 %v408
        %v410 = vpop.f32.mrf.mxu0
        %v411 = vadd.f32 %v386, %v410
        %412 = vdwg.mxu0
        %v413 = vld [vmem:[#allocation7] sm:$0xff]
        %415 = vrot.lane.b32.xlu0 %v411, 112
        %v416 = vpop.permute.xlu0 %415
        %vm417 = vcmask 130048
        %v418 = vsel %vm417, %v411, 0
        %v420 = vsel %vm417, %v416, 0
        %422 = vmatpush.xpose.msra.mxu0 0.0
        %423 = vmatpush.xpose.msra.mxu0 0.0
        %424 = vmatpush.xpose.msra.mxu0 0.0
        %425 = vmatpush.xpose.msra.mxu0 0.0
        %426 = vmatpush.xpose.msra.mxu0 0.0
        %427 = vmatpush.xpose.msra.mxu0 0.0
        %428 = vmatpush.xpose.msra.mxu0 0.0
        %429 = vmatpush.xpose.msra.mxu0 0.0
        %430 = vmatpush.xpose.msra.mxu0 0.0
        %431 = vmatpush.xpose.msra.mxu0 0.0
        %432 = vmatpush.xpose.msra.mxu0 0.0
        %433 = vmatpush.xpose.msra.mxu0 0.0
        %434 = vmatpush.xpose.msra.mxu0 0.0
        %435 = vmatpush.xpose.msra.mxu0 0.0
        %436 = vmatpush.xpose.msra.mxu0 0.0
        %v437 = vand.u32 %v420, 4294901760
        %438 = vmatpush.xpose.msra.mxu0 %v437
        %v439 = vand.u32 %v418, 4294901760
        %v440 = vsub.f32 %v418, %v439
        %v441 = vand.u32 %v440, 4294901760
        %v442 = vsub.f32 %v440, %v441
        %v443 = vand.u32 %v442, 4294901760
        %444 = vmatmul.f32.gmra.mxu0 %v443
        %v445 = vpop.f32.mrf.mxu0
        %v446 = vadd.f32 %v413, %v445
        %447 = vdwg.mxu0
        %448 = vmatpush.xpose.msra.mxu0 0.0
        %449 = vmatpush.xpose.msra.mxu0 0.0
        %450 = vmatpush.xpose.msra.mxu0 0.0
        %451 = vmatpush.xpose.msra.mxu0 0.0
        %452 = vmatpush.xpose.msra.mxu0 0.0
        %453 = vmatpush.xpose.msra.mxu0 0.0
        %454 = vmatpush.xpose.msra.mxu0 0.0
        %455 = vmatpush.xpose.msra.mxu0 0.0
        %456 = vmatpush.xpose.msra.mxu0 0.0
        %457 = vmatpush.xpose.msra.mxu0 0.0
        %458 = vmatpush.xpose.msra.mxu0 0.0
        %459 = vmatpush.xpose.msra.mxu0 0.0
        %460 = vmatpush.xpose.msra.mxu0 0.0
        %461 = vmatpush.xpose.msra.mxu0 0.0
        %462 = vmatpush.xpose.msra.mxu0 0.0
        %v463 = vand.u32 %v420, 4294901760
        %v464 = vsub.f32 %v420, %v463
        %v465 = vand.u32 %v464, 4294901760
        %v466 = vsub.f32 %v464, %v465
        %v467 = vand.u32 %v466, 4294901760
        %468 = vmatpush.xpose.msra.mxu0 %v467
        %v469 = vand.u32 %v418, 4294901760
        %470 = vmatmul.f32.gmra.mxu0 %v469
        %v471 = vpop.f32.mrf.mxu0
        %v472 = vadd.f32 %v446, %v471
        %473 = vdwg.mxu0
        %474 = vmatpush.xpose.msra.mxu0 0.0
        %475 = vmatpush.xpose.msra.mxu0 0.0
        %476 = vmatpush.xpose.msra.mxu0 0.0
        %477 = vmatpush.xpose.msra.mxu0 0.0
        %478 = vmatpush.xpose.msra.mxu0 0.0
        %479 = vmatpush.xpose.msra.mxu0 0.0
        %480 = vmatpush.xpose.msra.mxu0 0.0
        %481 = vmatpush.xpose.msra.mxu0 0.0
        %482 = vmatpush.xpose.msra.mxu0 0.0
        %483 = vmatpush.xpose.msra.mxu0 0.0
        %484 = vmatpush.xpose.msra.mxu0 0.0
        %485 = vmatpush.xpose.msra.mxu0 0.0
        %486 = vmatpush.xpose.msra.mxu0 0.0
        %487 = vmatpush.xpose.msra.mxu0 0.0
        %488 = vmatpush.xpose.msra.mxu0 0.0
        %v489 = vand.u32 %v420, 4294901760
        %v490 = vsub.f32 %v420, %v489
        %491 = vmatpush.xpose.msra.mxu0 %v490
        %v492 = vand.u32 %v418, 4294901760
        %v493 = vsub.f32 %v418, %v492
        %494 = vmatmul.f32.gmra.mxu0 %v493
        %v495 = vpop.f32.mrf.mxu0
        %v496 = vadd.f32 %v472, %v495
        %497 = vdwg.mxu0
        %498 = vmatpush.xpose.msra.mxu0 0.0
        %499 = vmatpush.xpose.msra.mxu0 0.0
        %500 = vmatpush.xpose.msra.mxu0 0.0
        %501 = vmatpush.xpose.msra.mxu0 0.0
        %502 = vmatpush.xpose.msra.mxu0 0.0
        %503 = vmatpush.xpose.msra.mxu0 0.0
        %504 = vmatpush.xpose.msra.mxu0 0.0
        %505 = vmatpush.xpose.msra.mxu0 0.0
        %506 = vmatpush.xpose.msra.mxu0 0.0
        %507 = vmatpush.xpose.msra.mxu0 0.0
        %508 = vmatpush.xpose.msra.mxu0 0.0
        %509 = vmatpush.xpose.msra.mxu0 0.0
        %510 = vmatpush.xpose.msra.mxu0 0.0
        %511 = vmatpush.xpose.msra.mxu0 0.0
        %512 = vmatpush.xpose.msra.mxu0 0.0
        %v513 = vand.u32 %v420, 4294901760
        %514 = vmatpush.xpose.msra.mxu0 %v513
        %v515 = vand.u32 %v418, 4294901760
        %v516 = vsub.f32 %v418, %v515
        %v517 = vand.u32 %v516, 4294901760
        %518 = vmatmul.f32.gmra.mxu0 %v517
        %v519 = vpop.f32.mrf.mxu0
        %v520 = vadd.f32 %v496, %v519
        %521 = vdwg.mxu0
        %522 = vmatpush.xpose.msra.mxu0 0.0
        %523 = vmatpush.xpose.msra.mxu0 0.0
        %524 = vmatpush.xpose.msra.mxu0 0.0
        %525 = vmatpush.xpose.msra.mxu0 0.0
        %526 = vmatpush.xpose.msra.mxu0 0.0
        %527 = vmatpush.xpose.msra.mxu0 0.0
        %528 = vmatpush.xpose.msra.mxu0 0.0
        %529 = vmatpush.xpose.msra.mxu0 0.0
        %530 = vmatpush.xpose.msra.mxu0 0.0
        %531 = vmatpush.xpose.msra.mxu0 0.0
        %532 = vmatpush.xpose.msra.mxu0 0.0
        %533 = vmatpush.xpose.msra.mxu0 0.0
        %534 = vmatpush.xpose.msra.mxu0 0.0
        %535 = vmatpush.xpose.msra.mxu0 0.0
        %536 = vmatpush.xpose.msra.mxu0 0.0
        %v537 = vand.u32 %v420, 4294901760
        %v538 = vsub.f32 %v420, %v537
        %v539 = vand.u32 %v538, 4294901760
        %540 = vmatpush.xpose.msra.mxu0 %v539
        %v541 = vand.u32 %v418, 4294901760
        %542 = vmatmul.f32.gmra.mxu0 %v541
        %v543 = vpop.f32.mrf.mxu0
        %v544 = vadd.f32 %v520, %v543
        %545 = vdwg.mxu0
        %546 = vmatpush.xpose.msra.mxu0 0.0
        %547 = vmatpush.xpose.msra.mxu0 0.0
        %548 = vmatpush.xpose.msra.mxu0 0.0
        %549 = vmatpush.xpose.msra.mxu0 0.0
        %550 = vmatpush.xpose.msra.mxu0 0.0
        %551 = vmatpush.xpose.msra.mxu0 0.0
        %552 = vmatpush.xpose.msra.mxu0 0.0
        %553 = vmatpush.xpose.msra.mxu0 0.0
        %554 = vmatpush.xpose.msra.mxu0 0.0
        %555 = vmatpush.xpose.msra.mxu0 0.0
        %556 = vmatpush.xpose.msra.mxu0 0.0
        %557 = vmatpush.xpose.msra.mxu0 0.0
        %558 = vmatpush.xpose.msra.mxu0 0.0
        %559 = vmatpush.xpose.msra.mxu0 0.0
        %560 = vmatpush.xpose.msra.mxu0 0.0
        %v561 = vand.u32 %v420, 4294901760
        %562 = vmatpush.xpose.msra.mxu0 %v561
        %v563 = vand.u32 %v418, 4294901760
        %564 = vmatmul.f32.gmra.mxu0 %v563
        %v565 = vpop.f32.mrf.mxu0
        %v566 = vadd.f32 %v544, %v565
        %567 = vdwg.mxu0
        %vm568 = vcmask 64512
        %v569 = vsel %vm568, %v566, -inf
        %v570 = vrot.slane %v569, 4
        %v571 = vmax.f32 %v569, %v570
        %v572 = vrot.slane %v571, 2
        %v573 = vmax.f32 %v571, %v572
        %v574 = vrot.slane %v573, 1
        %v575 = vmax.f32 %v573, %v574
        %v576 = vsub.f32 %v566, %v575
        %v577 = vmul.f32 %v576, 1.442695
        %v578 = vpow.pop %v577
        %v579 = vsel %vm568, %v578, 0.0
        %v580 = vrot.slane %v579, 4
        %v581 = vadd.f32 %v579, %v580
        %v582 = vrot.slane %v581, 2
        %v583 = vadd.f32 %v581, %v582
        %v584 = vrot.slane %v583, 1
        %v585 = vadd.f32 %v583, %v584
        %v586 = vrcp.pop %v585
        %v587 = vmul.f32 %v585, %v586
        %v588 = vsub.f32 1.0, %v587
        %v589 = vmul.f32 %v586, %v588
        %v590 = vadd.f32 %v586, %v589
        %vm591 = vweird.f32 %v585
        %vm592 = vweird.f32 %v586
        %vm593 = vmor %vm591, %vm592
        %v594 = vsel %vm593, %v586, %v590
        %v595 = vand.u32 2147483647, %v585
        %vm596 = vcmp.eq.f32.partialorder %v595, 8.507059e+37
        %v597 = vand.u32 %v585, 2147483648
        %v598 = vor.u32 1.1754944e-38, %v597
        %v599 = vsel %vm596, %v598, %v594
        %v600 = vmul.f32 %v578, %v599
        %601 = vrot.lane.b32.xlu0 %v411, 96
        %v602 = vpop.permute.xlu0 %601
        %v605 = vsel %vm568, %v600, 0
        %607 = vmatpush.msra.mxu0 0.0
        %608 = vmatpush.msra.mxu0 0.0
        %609 = vmatpush.msra.mxu0 0.0
        %610 = vmatpush.msra.mxu0 0.0
        %611 = vmatpush.msra.mxu0 0.0
        %612 = vmatpush.msra.mxu0 0.0
        %613 = vmatpush.msra.mxu0 0.0
        %614 = vmatpush.msra.mxu0 0.0
        %615 = vmatpush.msra.mxu0 0.0
        %616 = vmatpush.msra.mxu0 0.0
        %617 = vmatpush.msra.mxu0 0.0
        %618 = vmatpush.msra.mxu0 0.0
        %619 = vmatpush.msra.mxu0 0.0
        %620 = vmatpush.msra.mxu0 0.0
        %621 = vmatpush.msra.mxu0 0.0
        %v622 = vand.u32 %v602, 4294901760
        %623 = vmatpush.msra.mxu0 %v622
        %v624 = vand.u32 %v605, 4294901760
        %v625 = vsub.f32 %v605, %v624
        %v626 = vand.u32 %v625, 4294901760
        %v627 = vsub.f32 %v625, %v626
        %v628 = vand.u32 %v627, 4294901760
        %629 = vmatmul.f32.gmra.mxu0 %v628
        %v630 = vpop.f32.mrf.mxu0
        %v631 = vadd.f32 0.0, %v630
        %632 = vdwg.mxu0
        %633 = vmatpush.msra.mxu0 0.0
        %634 = vmatpush.msra.mxu0 0.0
        %635 = vmatpush.msra.mxu0 0.0
        %636 = vmatpush.msra.mxu0 0.0
        %637 = vmatpush.msra.mxu0 0.0
        %638 = vmatpush.msra.mxu0 0.0
        %639 = vmatpush.msra.mxu0 0.0
        %640 = vmatpush.msra.mxu0 0.0
        %641 = vmatpush.msra.mxu0 0.0
        %642 = vmatpush.msra.mxu0 0.0
        %643 = vmatpush.msra.mxu0 0.0
        %644 = vmatpush.msra.mxu0 0.0
        %645 = vmatpush.msra.mxu0 0.0
        %646 = vmatpush.msra.mxu0 0.0
        %647 = vmatpush.msra.mxu0 0.0
        %v648 = vand.u32 %v602, 4294901760
        %v649 = vsub.f32 %v602, %v648
        %v650 = vand.u32 %v649, 4294901760
        %v651 = vsub.f32 %v649, %v650
        %v652 = vand.u32 %v651, 4294901760
        %653 = vmatpush.msra.mxu0 %v652
        %v654 = vand.u32 %v605, 4294901760
        %655 = vmatmul.f32.gmra.mxu0 %v654
        %v656 = vpop.f32.mrf.mxu0
        %v657 = vadd.f32 %v631, %v656
        %658 = vdwg.mxu0
        %659 = vmatpush.msra.mxu0 0.0
        %660 = vmatpush.msra.mxu0 0.0
        %661 = vmatpush.msra.mxu0 0.0
        %662 = vmatpush.msra.mxu0 0.0
        %663 = vmatpush.msra.mxu0 0.0
        %664 = vmatpush.msra.mxu0 0.0
        %665 = vmatpush.msra.mxu0 0.0
        %666 = vmatpush.msra.mxu0 0.0
        %667 = vmatpush.msra.mxu0 0.0
        %668 = vmatpush.msra.mxu0 0.0
        %669 = vmatpush.msra.mxu0 0.0
        %670 = vmatpush.msra.mxu0 0.0
        %671 = vmatpush.msra.mxu0 0.0
        %672 = vmatpush.msra.mxu0 0.0
        %673 = vmatpush.msra.mxu0 0.0
        %v674 = vand.u32 %v602, 4294901760
        %v675 = vsub.f32 %v602, %v674
        %676 = vmatpush.msra.mxu0 %v675
        %v677 = vand.u32 %v605, 4294901760
        %v678 = vsub.f32 %v605, %v677
        %679 = vmatmul.f32.gmra.mxu0 %v678
        %v680 = vpop.f32.mrf.mxu0
        %v681 = vadd.f32 %v657, %v680
        %682 = vdwg.mxu0
        %683 = vmatpush.msra.mxu0 0.0
        %684 = vmatpush.msra.mxu0 0.0
        %685 = vmatpush.msra.mxu0 0.0
        %686 = vmatpush.msra.mxu0 0.0
        %687 = vmatpush.msra.mxu0 0.0
        %688 = vmatpush.msra.mxu0 0.0
        %689 = vmatpush.msra.mxu0 0.0
        %690 = vmatpush.msra.mxu0 0.0
        %691 = vmatpush.msra.mxu0 0.0
        %692 = vmatpush.msra.mxu0 0.0
        %693 = vmatpush.msra.mxu0 0.0
        %694 = vmatpush.msra.mxu0 0.0
        %695 = vmatpush.msra.mxu0 0.0
        %696 = vmatpush.msra.mxu0 0.0
        %697 = vmatpush.msra.mxu0 0.0
        %v698 = vand.u32 %v602, 4294901760
        %699 = vmatpush.msra.mxu0 %v698
        %v700 = vand.u32 %v605, 4294901760
        %v701 = vsub.f32 %v605, %v700
        %v702 = vand.u32 %v701, 4294901760
        %703 = vmatmul.f32.gmra.mxu0 %v702
        %v704 = vpop.f32.mrf.mxu0
        %v705 = vadd.f32 %v681, %v704
        %706 = vdwg.mxu0
        %707 = vmatpush.msra.mxu0 0.0
        %708 = vmatpush.msra.mxu0 0.0
        %709 = vmatpush.msra.mxu0 0.0
        %710 = vmatpush.msra.mxu0 0.0
        %711 = vmatpush.msra.mxu0 0.0
        %712 = vmatpush.msra.mxu0 0.0
        %713 = vmatpush.msra.mxu0 0.0
        %714 = vmatpush.msra.mxu0 0.0
        %715 = vmatpush.msra.mxu0 0.0
        %716 = vmatpush.msra.mxu0 0.0
        %717 = vmatpush.msra.mxu0 0.0
        %718 = vmatpush.msra.mxu0 0.0
        %719 = vmatpush.msra.mxu0 0.0
        %720 = vmatpush.msra.mxu0 0.0
        %721 = vmatpush.msra.mxu0 0.0
        %v722 = vand.u32 %v602, 4294901760
        %v723 = vsub.f32 %v602, %v722
        %v724 = vand.u32 %v723, 4294901760
        %725 = vmatpush.msra.mxu0 %v724
        %v726 = vand.u32 %v605, 4294901760
        %727 = vmatmul.f32.gmra.mxu0 %v726
        %v728 = vpop.f32.mrf.mxu0
        %v729 = vadd.f32 %v705, %v728
        %730 = vdwg.mxu0
        %731 = vmatpush.msra.mxu0 0.0
        %732 = vmatpush.msra.mxu0 0.0
        %733 = vmatpush.msra.mxu0 0.0
        %734 = vmatpush.msra.mxu0 0.0
        %735 = vmatpush.msra.mxu0 0.0
        %736 = vmatpush.msra.mxu0 0.0
        %737 = vmatpush.msra.mxu0 0.0
        %738 = vmatpush.msra.mxu0 0.0
        %739 = vmatpush.msra.mxu0 0.0
        %740 = vmatpush.msra.mxu0 0.0
        %741 = vmatpush.msra.mxu0 0.0
        %742 = vmatpush.msra.mxu0 0.0
        %743 = vmatpush.msra.mxu0 0.0
        %744 = vmatpush.msra.mxu0 0.0
        %745 = vmatpush.msra.mxu0 0.0
        %v746 = vand.u32 %v602, 4294901760
        %747 = vmatpush.msra.mxu0 %v746
        %v748 = vand.u32 %v605, 4294901760
        %749 = vmatmul.f32.gmra.mxu0 %v748
        %v750 = vpop.f32.mrf.mxu0
        %v751 = vadd.f32 %v729, %v750
        %752 = vdwg.mxu0
        %753 = vst.msk [vmem:[%s218] sm:$0xff] %vm417, %v751
        %s754 = sand.u32 %s97, 1
        %s755 = scalar_lea.sflag [#allocation4], %s754
        %s756 = sand.u32 %s97, 1
        %s757 = smul.addr %s756, 8
        %s758 = scalar_lea.vmem [#allocation8], %s757
        // Predicated region
        $region45: #{tpu_custom_call.1} parent=31 // pred_check
          %p759 = pneg %p107
        $region46: #{tpu_custom_call.1} parent=31 // pred_check_branch
          %761 = sbr.rel (%p759) target = $region48
        $region47: #{tpu_custom_call.1} parent=31 // pred_region
          %763 = vsyncadd %s755, 0
          %s764 = smul.addr %s21, 8
          %s765 = scalar_lea.hbm %s3, %s764
          %s767 = sshll.u32 %s758, 4
          %s768 = int_to_ptr.vmem [resolvable:$true] %s767
          %s769 = sshll.u32 %s765, 4
          %s770 = int_to_ptr.hbm [resolvable:$true] %s769
          %772 = dma.vmem_to_hbm [thread:$0]  %s768, 128, %s770, %s755
        $region48: #{tpu_custom_call.1} parent=31 // pred_fallthru
          _
      $region32: #{tpu_custom_call.1} parent=5 // pred_fallthru
        _
      %p773 = scmp.le.s32.totalorder 2, %s16
      // Predicated region
      $region49: #{tpu_custom_call.1} parent=5 // pred_check
        %p774 = pneg %p773
      $region50: #{tpu_custom_call.1} parent=5 // pred_check_branch
        %776 = sbr.rel (%p774) target = $region52
      $region51: #{tpu_custom_call.1} parent=5 // pred_region
        %s777 = ssub.s32 %s16, 2
        // Predicated region
        $region53: #{tpu_custom_call.1} parent=51 // pred_check
          %p778 = pneg %p113
        $region54: #{tpu_custom_call.1} parent=51 // pred_check_branch
          %780 = sbr.rel (%p778) target = $region56
        $region55: #{tpu_custom_call.1} parent=51 // pred_region
          %s781 = sand.u32 %s98, 1
          %s782 = scalar_lea.sflag [#allocation4], %s781
          %s783 = sand.u32 %s98, 1
          %s784 = smul.addr %s783, 8
          %s785 = scalar_lea.vmem [#allocation8], %s784
          %787 = dma.done %s782, 128
        $region56: #{tpu_custom_call.1} parent=51 // pred_fallthru
          _
      $region52: #{tpu_custom_call.1} parent=5 // pred_fallthru
        _
    $region6: #{tpu_custom_call.1} parent=1 // loop_footer
      %s20 = sadd.s32 1, %s16
    $region7: #{tpu_custom_call.1} parent=1 // loop_footer_branch
      %15 = sbr.rel target = $region3
    $region8: #{tpu_custom_call.1} parent=1 // loop_exit
      _
    %788 = vsyncpa [#allocation3], 1
    %s789 = scalar_lea.sflag [#allocation3], 1
    %790 = vsyncpa %s789, 1
    %791 = vsyncpa [#allocation6], 1
    %792 = vsyncpa [#allocation4], 1
    %s793 = scalar_lea.sflag [#allocation4], 1
    %794 = vsyncpa %s793, 1

</llo_original>
